<compile_context>
chip_gen: v5e
topology: v5e:2x2
jax: 0.10.0
libtpu: 0.0.40
codegen_flags: <defaults>
</compile_context>

<pallas_src>
import functools

import jax
import jax.numpy as jnp
from jax.experimental import pallas as pl
from jax.experimental.pallas import tpu as pltpu


def _round_up(x: int, m: int) -> int:
    return ((x + m - 1) // m) * m


@functools.lru_cache(maxsize=1)
def _vmem_capacity_bytes() -> int:
    try:
        return int(pltpu.get_tpu_info().vmem_capacity_bytes)
    except Exception:
        # Most constrained generation (v7x: 64 MiB / TensorCore) as fallback.
        return 64 * 1024 * 1024


def _vmem_budget() -> tuple[int, int]:
    """(vmem_limit_bytes for CompilerParams, working budget for tiling)."""
    cap = _vmem_capacity_bytes()
    vmem_limit = int(cap * 0.75)          # ~48 MiB on v7x, ~96 MiB on v5e/v6e
    budget = vmem_limit - (2 << 20)       # headroom for Mosaic internals
    return vmem_limit, budget


def _choose_tile_n(dp: int) -> int:
    """Output-column tile. dp -> W fully resident; smaller -> W streamed."""
    _, budget = _vmem_budget()
    w_full = dp * (2 * dp) * 2            # fused bf16 weight, single buffer
    if w_full <= budget // 3:
        return dp
    tn = 128
    while 2 * tn <= dp:
        nxt = 2 * tn
        w_block = dp * (2 * nxt) * 2      # bf16 per-block weight
        if 2 * w_block > budget // 3:     # double-buffered while streaming
            break
        tn = nxt
    return tn


def _choose_tile_m(m: int, dp: int, tile_n: int) -> tuple[int, int]:
    """Row tile + vmem limit, sized to the generation's VMEM."""
    vmem_limit, budget = _vmem_budget()
    if tile_n == dp:
        w_bytes = dp * (2 * dp) * 2                   # resident, 1 buffer
    else:
        w_bytes = 2 * (dp * (2 * tile_n) * 2)         # streamed, 2 buffers
    # x (f32, x2 bufs) + out (f32, x2 bufs) + f32 acc/h/t temporaries.
    per_row = 2 * dp * 4 + 2 * tile_n * 4 + 3 * (2 * tile_n) * 4
    tile_m_cap = max(8, (budget - w_bytes) // per_row)
    tile_m_cap = min(1024, max(8, (tile_m_cap // 8) * 8))
    # Guarantee >=2 row-grid steps (v7x megacore sharding + pipeline overlap).
    tile_m = min(tile_m_cap, max(8, _round_up(pl.cdiv(m, 2), 8)))
    return tile_m, vmem_limit


def highway_kernel(x_ref, w_ref, b_ref, o_ref):
    tn = o_ref.shape[-1]
    dp = x_ref.shape[-1]

    x = x_ref[...]                                          # [tm, Dp] f32

    # Single wide matmul on the MXU: bf16 inputs, f32 accumulation.
    acc = jnp.dot(
        x.astype(jnp.bfloat16), w_ref[...],
        preferred_element_type=jnp.float32,
    ) + b_ref[...]                                          # [tm, 2*tn] f32

    h = jnp.maximum(acc[:, :tn], 0.0)                       # relu(x Wh + bh)
    z = jnp.maximum(acc[:, tn:], -30.0)                     # clamp: exp stays finite
    t = pl.reciprocal(1.0 + jnp.exp(-z), approx=True)       # sigmoid on EUP

    # Residual columns for this output block (out_size == in_size).
    if tn == dp:
        xr = x
    else:
        col0 = pl.multiple_of(pl.program_id(1) * tn, 128)   # lane-tile aligned
        xr = x_ref[:, pl.ds(col0, tn)]

    # h*t + x*(1-t)  ==  x + t*(h - x)
    o_ref[...] = (xr + t * (h - xr)).astype(o_ref.dtype)


def _highway_pallas(x_p, w_fused, b_fused, *, tile_m, tile_n, vmem_limit):
    """x_p: [M, Dp] f32; w_fused: [Dp, 2*Dp] bf16 ([H_j|T_j] per col block);
    b_fused: [1, 2*Dp] f32."""
    m, dp = x_p.shape
    nb = dp // tile_n
    grid = (pl.cdiv(m, tile_m), nb)

    if nb == 1:
        # Constant index_map -> DMA'd once; one buffer saves Dp*2Dp*2 B of VMEM.
        w_spec = pl.BlockSpec((dp, 2 * tile_n), lambda i, j: (0, j),
                              pipeline_mode=pl.Buffered(1))
        b_spec = pl.BlockSpec((1, 2 * tile_n), lambda i, j: (0, j),
                              pipeline_mode=pl.Buffered(1))
    else:
        # Streamed column blocks: keep default double-buffering for overlap.
        w_spec = pl.BlockSpec((dp, 2 * tile_n), lambda i, j: (0, j))
        b_spec = pl.BlockSpec((1, 2 * tile_n), lambda i, j: (0, j))

    flops = 2 * m * dp * (2 * dp) + 8 * m * dp
    bytes_accessed = (x_p.size * 4 + w_fused.size * 2 + b_fused.size * 4
                      + m * dp * 4)

    return pl.pallas_call(
        highway_kernel,
        out_shape=jax.ShapeDtypeStruct((m, dp), x_p.dtype),
        grid_spec=pltpu.PrefetchScalarGridSpec(
            num_scalar_prefetch=0,
            grid=grid,
            in_specs=[
                pl.BlockSpec((tile_m, dp), lambda i, j: (i, 0)),   # x row tile (full K)
                w_spec,                                            # fused W (bf16)
                b_spec,                                            # fused bias (f32)
            ],
            out_specs=pl.BlockSpec((tile_m, tile_n), lambda i, j: (i, j)),
        ),
        compiler_params=pltpu.CompilerParams(
            dimension_semantics=("parallel", "arbitrary"),
            vmem_limit_bytes=vmem_limit,
        ),
        cost_estimate=pl.CostEstimate(
            flops=flops,
            transcendentals=m * dp,
            bytes_accessed=bytes_accessed,
        ),
    )(x_p, w_fused, b_fused)


def prepare_highway_params(wh, bh, wt, bt):
    """One-time fusion of the two nn.Linear layers (hoisted out of the forward
    path). Returns (w_fused [Dp, 2Dp] bf16, b_fused [1, 2Dp] f32, d, dp, tile_n).

    Columns are interleaved per output-column block j as [H_j | T_j] so the
    gate combine stays local to each block when the kernel N-tiles W.
    """
    d = wh.shape[0]
    dp = _round_up(d, 128)
    tile_n = _choose_tile_n(dp)
    nb = dp // tile_n

    pad2 = ((0, dp - d), (0, dp - d))
    wh_t = jnp.pad(wh.T.astype(jnp.float32), pad2).reshape(dp, nb, tile_n)
    wt_t = jnp.pad(wt.T.astype(jnp.float32), pad2).reshape(dp, nb, tile_n)
    w_fused = jnp.stack([wh_t, wt_t], axis=2).reshape(dp, 2 * dp)
    w_fused = w_fused.astype(jnp.bfloat16)

    bh_p = jnp.pad(bh.astype(jnp.float32), (0, dp - d)).reshape(nb, tile_n)
    bt_p = jnp.pad(bt.astype(jnp.float32), (0, dp - d)).reshape(nb, tile_n)
    b_fused = jnp.stack([bh_p, bt_p], axis=1).reshape(1, 2 * dp)

    return w_fused, b_fused, d, dp, tile_n


@functools.partial(
    jax.jit, static_argnames=("d", "dp", "tile_m", "tile_n", "vmem_limit"))
def _highway_2d(x2d, w_fused, b_fused, *, d, dp, tile_m, tile_n, vmem_limit):
    if dp != d:
        # Feature dim not 128-aligned: lane-pad (zeros keep the matmul exact).
        x2d = jnp.pad(x2d, ((0, 0), (0, dp - d)))
    out = _highway_pallas(x2d, w_fused, b_fused,
                          tile_m=tile_m, tile_n=tile_n, vmem_limit=vmem_limit)
    if dp != d:
        out = out[:, :d]
    return out


def highway_forward(x, w_fused, b_fused, d, dp, tile_n):
    """x: [..., d]; fused params from prepare_highway_params()."""
    orig_shape = x.shape
    x2d = x.reshape(-1, d).astype(jnp.float32)
    m = x2d.shape[0]
    tile_m, vmem_limit = _choose_tile_m(m, dp, tile_n)
    out = _highway_2d(x2d, w_fused, b_fused, d=d, dp=dp,
                      tile_m=tile_m, tile_n=tile_n, vmem_limit=vmem_limit)
    return out.reshape(orig_shape)


def highway_reference(x, wh, bh, wt, bt):
    h = jax.nn.relu(x @ wh.T + bh)
    t = jax.nn.sigmoid(x @ wt.T + bt)
    return h * t + x * (1.0 - t)


if __name__ == "__main__":
    # Highway requires in_size == out_size for the residual term.
    in_size = out_size = 32
    batch, seq = 2, 8  # flattened rows M = 16

    key = jax.random.PRNGKey(0)
    kx, kwh, kwt = jax.random.split(key, 3)

    x = jax.random.normal(kx, (batch, seq, in_size), dtype=jnp.float32)

    # Deterministic parameter init (mimicking nn.Linear + the module's bias init).
    wh = jax.random.normal(kwh, (out_size, in_size), dtype=jnp.float32) * 0.1
    bh = jnp.zeros((out_size,), dtype=jnp.float32)          # H.bias.data.zero_()
    wt = jax.random.normal(kwt, (out_size, in_size), dtype=jnp.float32) * 0.1
    bt = jnp.full((out_size,), -1.0, dtype=jnp.float32)     # T.bias.data.fill_(-1)

    # One-time weight fusion, hoisted out of the per-call forward path.
    w_fused, b_fused, d, dp, tile_n = prepare_highway_params(wh, bh, wt, bt)
    (w_fused, b_fused) = jax.block_until_ready((w_fused, b_fused))

    out = highway_forward(x, w_fused, b_fused, d, dp, tile_n)
    out = jax.block_until_ready(out)

    ref = highway_reference(x, wh, bh, wt, bt)
    assert out.shape == x.shape
    # bf16 matmul inputs + approx reciprocal -> relaxed tolerance vs f32 reference.
    assert jnp.allclose(out, ref, atol=2e-2, rtol=2e-2), "mismatch vs reference"

    print("KERNEL_OK")
</pallas_src>

<mosaic_0001>
module attributes {stable_mosaic.version = 11 : i64} {
  func.func @highway_kernel(%arg0: i32, %arg1: i32, %arg2: memref<8x128xf32, #tpu.memory_space<vmem>>, %arg3: memref<128x256xbf16, #tpu.memory_space<vmem>>, %arg4: memref<1x256xf32, #tpu.memory_space<vmem>>, %arg5: memref<8x128xf32, #tpu.memory_space<vmem>>) attributes {dimension_semantics = [#tpu.dimension_semantics<parallel>, #tpu.dimension_semantics<arbitrary>], iteration_bounds = array<i64: 2, 1>, scalar_prefetch = 0 : i64, scratch_operands = 0 : i64, tpu.core_type = #tpu.core_type<tc>, window_params = [{transform_indices = @transform_0, window_bounds = array<i64: 8, 128>}, {pipeline_mode = #tpu.pipeline_mode<synchronous>, transform_indices = @transform_1, window_bounds = array<i64: 128, 256>}, {pipeline_mode = #tpu.pipeline_mode<synchronous>, transform_indices = @transform_2, window_bounds = array<i64: 1, 256>}, {transform_indices = @transform_3, window_bounds = array<i64: 8, 128>}]} {
    %c0 = arith.constant 0 : index
    %c0_0 = arith.constant 0 : index
    %0 = vector.load %arg2[%c0, %c0_0] : memref<8x128xf32, #tpu.memory_space<vmem>>, vector<8x128xf32>
    %1 = arith.truncf %0 : vector<8x128xf32> to vector<8x128xbf16>
    %c0_1 = arith.constant 0 : index
    %c0_2 = arith.constant 0 : index
    %2 = vector.load %arg3[%c0_1, %c0_2] : memref<128x256xbf16, #tpu.memory_space<vmem>>, vector<128x256xbf16>
    %cst = arith.constant dense<0.000000e+00> : vector<8x256xf32>
    %3 = tpu.matmul %1, %2, %cst {dimension_numbers = #tpu.dot_dimension_numbers<[1], [0], [0], [1], [0, 0, 1, 1], [], []>} : vector<8x128xbf16>, vector<128x256xbf16>, vector<8x256xf32> -> vector<8x256xf32>
    %c0_3 = arith.constant 0 : index
    %c0_4 = arith.constant 0 : index
    %4 = vector.load %arg4[%c0_3, %c0_4] : memref<1x256xf32, #tpu.memory_space<vmem>>, vector<1x256xf32>
    %5 = vector.broadcast %4 : vector<1x256xf32> to vector<8x256xf32>
    %6 = arith.addf %3, %5 : vector<8x256xf32>
    %7 = vector.extract_strided_slice %6 {offsets = [0, 0], sizes = [8, 128], strides = [1, 1]} : vector<8x256xf32> to vector<8x128xf32>
    %cst_5 = arith.constant 0.000000e+00 : f32
    %8 = vector.broadcast %cst_5 : f32 to vector<8x128xf32>
    %9 = arith.maximumf %7, %8 : vector<8x128xf32>
    %10 = vector.extract_strided_slice %6 {offsets = [0, 128], sizes = [8, 128], strides = [1, 1]} : vector<8x256xf32> to vector<8x128xf32>
    %cst_6 = arith.constant -3.000000e+01 : f32
    %11 = vector.broadcast %cst_6 : f32 to vector<8x128xf32>
    %12 = arith.maximumf %10, %11 : vector<8x128xf32>
    %cst_7 = arith.constant 0.000000e+00 : f32
    %13 = vector.broadcast %cst_7 : f32 to vector<8x128xf32>
    %14 = arith.subf %13, %12 : vector<8x128xf32>
    %15 = math.exp %14 : vector<8x128xf32>
    %cst_8 = arith.constant 1.000000e+00 : f32
    %16 = vector.broadcast %cst_8 : f32 to vector<8x128xf32>
    %17 = arith.addf %16, %15 : vector<8x128xf32>
    %18 = tpu.reciprocal %17 {approx = true} : vector<8x128xf32> -> vector<8x128xf32>
    %19 = arith.subf %9, %0 : vector<8x128xf32>
    %20 = arith.mulf %18, %19 : vector<8x128xf32>
    %21 = arith.addf %0, %20 : vector<8x128xf32>
    %c0_9 = arith.constant 0 : index
    %c0_10 = arith.constant 0 : index
    %22 = vector.load %arg5[%c0_9, %c0_10] : memref<8x128xf32, #tpu.memory_space<vmem>>, vector<8x128xf32>
    tpu.vector_store %arg5[%c0_9, %c0_10], %21 {strides = array<i32>} : memref<8x128xf32, #tpu.memory_space<vmem>>, vector<8x128xf32>,
    return
  }
  func.func @transform_0(%arg0: i32, %arg1: i32) -> (i32, i32) {
    %c0_i32 = arith.constant 0 : i32
    %c0_i32_0 = arith.constant 0 : i32
    return %arg0, %c0_i32 : i32, i32
  }
  func.func @transform_1(%arg0: i32, %arg1: i32) -> (i32, i32) {
    %c0_i32 = arith.constant 0 : i32
    %c0_i32_0 = arith.constant 0 : i32
    return %c0_i32, %arg1 : i32, i32
  }
  func.func @transform_2(%arg0: i32, %arg1: i32) -> (i32, i32) {
    %c0_i32 = arith.constant 0 : i32
    %c0_i32_0 = arith.constant 0 : i32
    return %c0_i32, %arg1 : i32, i32
  }
  func.func @transform_3(%arg0: i32, %arg1: i32) -> (i32, i32) {
    %c0_i32 = arith.constant 0 : i32
    return %arg0, %arg1 : i32, i32
  }
}

</mosaic_0001>

<llo_original>
// kernel: _highway_2d.1
$region0: #{_highway_2d.1}
  #allocation0 [shape = 'u32[]', space=smem, size = 0x4, offset = 0x4, fixed_abs, tag = 'smem constant byte address 0x4 - core index']
  #allocation1 [shape = 'u32[72,128]{1,0:T(1,128)}', space=vmem, size = 0x9000, scoped, tag = 'internal scratch']
  %s0 = inlined_call_operand.vmem [shape: f32[16,128], index: 0, kind: input, shape index: {}]
  %s1 = inlined_call_operand.hbm [shape: bf16[128,256], index: 1, kind: input, shape index: {}]
  %s2 = inlined_call_operand.vmem [shape: f32[1,256], index: 2, kind: input, shape index: {}]
  %s3 = inlined_call_operand.hbm [shape: f32[16,128], index: 3, kind: output, shape index: {}]
  %s4 = sld [smem:[#allocation0]]
  $region49: #{_highway_2d.1} parent=0
    _
  %s6 = ssub.s32 1, %s4
  %s7 = scalar_select 0, %s6, %s4
  $region1: #{_highway_2d.1} parent=0
    #allocation2 [shape = 'u8[65536]{0}', space=vmem, size = 0x10000, scoped, tag = 'input window, operand 1, single buffered']
    #allocation3 [shape = 's32[2]{0}', space=sflag, size = 0x8, scoped, tag = 'scoped memory for _highway_2d.1']
    #allocation4 [shape = 's32[2]{0}', space=sflag, size = 0x8, scoped, tag = 'scoped memory for _highway_2d.1']
    #allocation5 [shape = 'u8[8192]{0}', space=vmem, size = 0x2000, scoped, tag = 'output window, operand 0']
    %8 = vsyncpa [#allocation3], 0
    %9 = vsyncpa [#allocation4], 0
    %s10 = scalar_lea.sflag [#allocation4], 1
    %11 = vsyncpa %s10, 0
    loop: start=0, step=1, limit=4
    $region2: #{_highway_2d.1} parent=1 // loop_pre_header
      _
    $region3: #{_highway_2d.1} parent=1 // loop_header
      %s13 = sphi 0, %s17
      %p14 = scmp.ge.s32.totalorder %s13, 4
      %s20 = sphi 0, %s32
      %s21 = sphi 0, %s28
      %s22 = sphi 0, %s20
      %s23 = sphi 0, %s21
      %s24 = sphi 0, %s22
      %s25 = sphi 0, %s23
      %s35 = sphi 0, %s37
      %s38 = sphi 0, %s35
      %s39 = sphi 0, %s38
      %s55 = sphi 0, %s39
      %s61 = sphi 0, %s63
      %s64 = sphi 0, %s61
      %s65 = sphi 0, %s64
      %s81 = sphi 0, %s65
      %s87 = sphi 0, %s89
      %s90 = sphi 0, %s87
      %s91 = sphi 0, %s90
      %s107 = sphi 0, %s91
      %s115 = sphi 0, %s117
      %s118 = sphi 0, %s115
      %s119 = sphi 0, %s118
      %s135 = sphi 0, %s119
    $region4: #{_highway_2d.1} parent=1 // loop_header_branch
      %16 = sbr.rel (%p14) target = $region8
    $region5: #{_highway_2d.1} parent=1 // loop_body
      %s18 = ssub.s32 %s13, 1
      %s19 = ssub.s32 %s13, 2
      %s26 = sadd.s32 1, %s21
      %p27 = scmp.ge.s32.totalorder %s26, 1
      %s28 = scalar_select %p27, 0, %s26
      %s29 = sadd.s32 1, %s20
      %s30 = scalar_select %p27, %s29, %s20
      %p31 = scmp.ge.s32.totalorder %s30, 2
      %s32 = scalar_select %p31, 0, %s30
      %s33 = ssub.s32 %s20, %s32
      %p34 = scmp.eq.s32.totalorder %s33, 0
      %s36 = sadd.s32 %s35, 1
      %s37 = scalar_select %p34, %s35, %s36
      %p40 = pneg %p34
      %p41 = scmp.eq.s32.totalorder %s13, 1
      %p42 = por %p40, %p41
      %p43 = scmp.ne.s32.totalorder %s35, %s38
      %p44 = scmp.eq.s32.totalorder %s13, 0
      %p45 = por %p43, %p44
      %p46 = scmp.ne.s32.totalorder %s35, %s38
      %p47 = scmp.eq.s32.totalorder %s18, 1
      %p48 = por %p46, %p47
      %p49 = scmp.ne.s32.totalorder %s38, %s39
      %p50 = scmp.eq.s32.totalorder %s18, 0
      %p51 = por %p49, %p50
      %p52 = scmp.ne.s32.totalorder %s38, %s39
      %p53 = scmp.eq.s32.totalorder %s19, 1
      %p54 = por %p52, %p53
      %p56 = scmp.ne.s32.totalorder %s39, %s55
      %p57 = scmp.eq.s32.totalorder %s19, 0
      %p58 = por %p56, %p57
      %s59 = ssub.s32 %s21, %s28
      %p60 = scmp.eq.s32.totalorder %s59, 0
      %s62 = sadd.s32 %s61, 1
      %s63 = scalar_select %p60, %s61, %s62
      %p66 = pneg %p60
      %p67 = scmp.eq.s32.totalorder %s13, 1
      %p68 = por %p66, %p67
      %p69 = scmp.ne.s32.totalorder %s61, %s64
      %p70 = scmp.eq.s32.totalorder %s13, 0
      %p71 = por %p69, %p70
      %p72 = scmp.ne.s32.totalorder %s61, %s64
      %p73 = scmp.eq.s32.totalorder %s18, 1
      %p74 = por %p72, %p73
      %p75 = scmp.ne.s32.totalorder %s64, %s65
      %p76 = scmp.eq.s32.totalorder %s18, 0
      %p77 = por %p75, %p76
      %p78 = scmp.ne.s32.totalorder %s64, %s65
      %p79 = scmp.eq.s32.totalorder %s19, 1
      %p80 = por %p78, %p79
      %p82 = scmp.ne.s32.totalorder %s65, %s81
      %p83 = scmp.eq.s32.totalorder %s19, 0
      %p84 = por %p82, %p83
      %s85 = ssub.s32 %s21, %s28
      %p86 = scmp.eq.s32.totalorder %s85, 0
      %s88 = sadd.s32 %s87, 1
      %s89 = scalar_select %p86, %s87, %s88
      %p92 = pneg %p86
      %p93 = scmp.eq.s32.totalorder %s13, 1
      %p94 = por %p92, %p93
      %p95 = scmp.ne.s32.totalorder %s87, %s90
      %p96 = scmp.eq.s32.totalorder %s13, 0
      %p97 = por %p95, %p96
      %p98 = scmp.ne.s32.totalorder %s87, %s90
      %p99 = scmp.eq.s32.totalorder %s18, 1
      %p100 = por %p98, %p99
      %p101 = scmp.ne.s32.totalorder %s90, %s91
      %p102 = scmp.eq.s32.totalorder %s18, 0
      %p103 = por %p101, %p102
      %p104 = scmp.ne.s32.totalorder %s90, %s91
      %p105 = scmp.eq.s32.totalorder %s19, 1
      %p106 = por %p104, %p105
      %p108 = scmp.ne.s32.totalorder %s91, %s107
      %p109 = scmp.eq.s32.totalorder %s19, 0
      %p110 = por %p108, %p109
      %s111 = ssub.s32 %s20, %s32
      %s112 = ssub.s32 %s21, %s28
      %s113 = sor.u32 %s111, %s112
      %p114 = scmp.eq.s32.totalorder %s113, 0
      %s116 = sadd.s32 %s115, 1
      %s117 = scalar_select %p114, %s115, %s116
      %p120 = pneg %p114
      %p121 = scmp.eq.s32.totalorder %s13, 1
      %p122 = por %p120, %p121
      %p123 = scmp.ne.s32.totalorder %s115, %s118
      %p124 = scmp.eq.s32.totalorder %s13, 0
      %p125 = por %p123, %p124
      %p126 = scmp.ne.s32.totalorder %s115, %s118
      %p127 = scmp.eq.s32.totalorder %s18, 1
      %p128 = por %p126, %p127
      %p129 = scmp.ne.s32.totalorder %s118, %s119
      %p130 = scmp.eq.s32.totalorder %s18, 0
      %p131 = por %p129, %p130
      %p132 = scmp.ne.s32.totalorder %s118, %s119
      %p133 = scmp.eq.s32.totalorder %s19, 1
      %p134 = por %p132, %p133
      %p136 = scmp.ne.s32.totalorder %s119, %s135
      %p137 = scmp.eq.s32.totalorder %s19, 0
      %p138 = por %p136, %p137
      %p139 = scmp.le.s32.totalorder 1, %s13
      %p140 = scmp.lt.s32.totalorder %s13, 3
      %p141 = pnand %p139, %p140
      %p142 = pneg %p141
      // Predicated region
      $region9: #{_highway_2d.1} parent=5 // pred_check
        _
      $region10: #{_highway_2d.1} parent=5 // pred_check_branch
        %144 = sbr.rel (%p141) target = $region12
      $region11: #{_highway_2d.1} parent=5 // pred_region
        %s145 = ssub.s32 %s13, 1
        // Predicated region
        $region13: #{_highway_2d.1} parent=11 // pred_check
          %p146 = pneg %p77
        $region14: #{_highway_2d.1} parent=11 // pred_check_branch
          %148 = sbr.rel (%p146) target = $region16
        $region15: #{_highway_2d.1} parent=11 // pred_region
          %s149 = smul.u32 2, %s23
          %151 = vsyncadd [#allocation3], 0
          %s152 = smul.addr %s149, 4
          %s153 = scalar_lea.hbm %s1, %s152
          %s154 = sshll.u32 %s153, 4
          %s155 = int_to_ptr.hbm [resolvable:$true] %s154
          %s156 = sshll.u32 [#allocation2], 4
          %s157 = int_to_ptr.vmem [resolvable:$true] %s156
          %162 = dma.hbm_to_vmem [thread:$0]  %s155, 2048, %s157, [#allocation3], 128, 128, 8
        $region16: #{_highway_2d.1} parent=11 // pred_fallthru
          _
        // Predicated region
        $region17: #{_highway_2d.1} parent=11 // pred_check
          %p163 = pneg %p103
        $region18: #{_highway_2d.1} parent=11 // pred_check_branch
          %165 = sbr.rel (%p163) target = $region20
        $region19: #{_highway_2d.1} parent=11 // pred_region
          %s166 = smul.u32 2, %s23
          %p167 = scmp.lt.s32.totalorder %s166, 1
          %s168 = scalar_select %p167, %s166, 1
          %s169 = scalar_lea.vmem %s2, %s168
          %s170 = smul.u32 2, %s23
        $region20: #{_highway_2d.1} parent=11 // pred_fallthru
          _
      $region12: #{_highway_2d.1} parent=5 // pred_fallthru
        _
      %p171 = scmp.lt.s32.totalorder %s13, 2
      // Predicated region
      $region21: #{_highway_2d.1} parent=5 // pred_check
        %p172 = pneg %p171
      $region22: #{_highway_2d.1} parent=5 // pred_check_branch
        %174 = sbr.rel (%p172) target = $region24
      $region23: #{_highway_2d.1} parent=5 // pred_region
        // Predicated region
        $region25: #{_highway_2d.1} parent=23 // pred_check
          %p175 = pneg %p45
        $region26: #{_highway_2d.1} parent=23 // pred_check_branch
          %177 = sbr.rel (%p175) target = $region28
        $region27: #{_highway_2d.1} parent=23 // pred_region
          %p178 = scmp.lt.s32.totalorder %s20, 1
          %s179 = scalar_select %p178, %s20, 1
          %s180 = smul.addr %s179, 8
          %s181 = scalar_lea.vmem %s0, %s180
        $region28: #{_highway_2d.1} parent=23 // pred_fallthru
          _
      $region24: #{_highway_2d.1} parent=5 // pred_fallthru
        _
      %p182 = scmp.le.s32.totalorder 1, %s13
      %p183 = scmp.lt.s32.totalorder %s13, 3
      %p184 = pnand %p182, %p183
      %p185 = pneg %p184
      // Predicated region
      $region29: #{_highway_2d.1} parent=5 // pred_check
        _
      $region30: #{_highway_2d.1} parent=5 // pred_check_branch
        %187 = sbr.rel (%p184) target = $region32
      $region31: #{_highway_2d.1} parent=5 // pred_region
        %s188 = ssub.s32 %s13, 1
        // Predicated region
        $region33: #{_highway_2d.1} parent=31 // pred_check
          %p189 = pneg %p77
        $region34: #{_highway_2d.1} parent=31 // pred_check_branch
          %191 = sbr.rel (%p189) target = $region36
        $region35: #{_highway_2d.1} parent=31 // pred_region
          %193 = dma.done [#allocation3], 2048
        $region36: #{_highway_2d.1} parent=31 // pred_fallthru
          _
        %p194 = scmp.lt.s32.totalorder %s22, 1
        %s195 = scalar_select %p194, %s22, 1
        %s196 = smul.addr %s195, 8
        %s197 = scalar_lea.vmem %s0, %s196
        %p198 = pneg %p51
        %p199 = pneg %p48
        %p200 = pneg %p77
        %p201 = pneg %p74
        %s202 = smul.u32 2, %s23
        %p203 = scmp.lt.s32.totalorder %s202, 1
        %s204 = scalar_select %p203, %s202, 1
        %s205 = scalar_lea.vmem %s2, %s204
        %p206 = pneg %p103
        %p207 = pneg %p100
        %p208 = pneg %p131
        %p209 = pneg %p128
        %s210 = sand.u32 %s118, 1
        %s211 = scalar_lea.sflag [#allocation4], %s210
        %s212 = sand.u32 %s118, 1
        %s213 = smul.addr %s212, 8
        %s214 = scalar_lea.vmem [#allocation5], %s213
        %p215 = scmp.lt.s32.totalorder %s22, 1
        %s216 = scalar_select %p215, %s22, 1
        %s217 = smul.addr %s216, 8
        %s218 = scalar_lea.vmem %s0, %s217
        %s219 = smul.u32 2, %s23
        %s220 = smul.u32 2, %s23
        %p221 = scmp.lt.s32.totalorder %s220, 1
        %s222 = scalar_select %p221, %s220, 1
        %s223 = scalar_lea.vmem %s2, %s222
        %s224 = smul.u32 2, %s23
        %v225 = vld [vmem:[%s218] sm:$0xff]
        %v226 = vpack.c.bf16 %v225, %v225
        %v227 = vld [vmem:[#allocation2] sm:$0xff]
        %v228 = vld [vmem:[#allocation2 + $0x8] sm:$0xff]
        %v229 = vld [vmem:[#allocation2 + $0x10] sm:$0xff]
        %v230 = vld [vmem:[#allocation2 + $0x18] sm:$0xff]
        %v231 = vld [vmem:[#allocation2 + $0x20] sm:$0xff]
        %v232 = vld [vmem:[#allocation2 + $0x28] sm:$0xff]
        %v233 = vld [vmem:[#allocation2 + $0x30] sm:$0xff]
        %v234 = vld [vmem:[#allocation2 + $0x38] sm:$0xff]
        %v235 = vld [vmem:[#allocation2 + $0x40] sm:$0xff]
        %v236 = vld [vmem:[#allocation2 + $0x48] sm:$0xff]
        %v237 = vld [vmem:[#allocation2 + $0x50] sm:$0xff]
        %v238 = vld [vmem:[#allocation2 + $0x58] sm:$0xff]
        %v239 = vld [vmem:[#allocation2 + $0x60] sm:$0xff]
        %v240 = vld [vmem:[#allocation2 + $0x68] sm:$0xff]
        %v241 = vld [vmem:[#allocation2 + $0x70] sm:$0xff]
        %v242 = vld [vmem:[#allocation2 + $0x78] sm:$0xff]
        %v243 = vld [vmem:[%s223] sm:$0x3]
        %v245 = vperm.slane %v243, 0
        %v246 = vperm.slane %v243, 1
        %v265 = vunpack.c.l.b16 %v227
        %v266 = vunpack.c.h.b16 %v227
        %v267 = vunpack.c.l.b16 %v228
        %v268 = vunpack.c.h.b16 %v228
        %v269 = vunpack.c.l.b16 %v229
        %v270 = vunpack.c.h.b16 %v229
        %v271 = vunpack.c.l.b16 %v230
        %v272 = vunpack.c.h.b16 %v230
        %v273 = vunpack.c.l.b16 %v231
        %v274 = vunpack.c.h.b16 %v231
        %v275 = vunpack.c.l.b16 %v232
        %v276 = vunpack.c.h.b16 %v232
        %v277 = vunpack.c.l.b16 %v233
        %v278 = vunpack.c.h.b16 %v233
        %v279 = vunpack.c.l.b16 %v234
        %v280 = vunpack.c.h.b16 %v234
        %v281 = vunpack.c.l.b16 %v235
        %v282 = vunpack.c.h.b16 %v235
        %v283 = vunpack.c.l.b16 %v236
        %v284 = vunpack.c.h.b16 %v236
        %v285 = vunpack.c.l.b16 %v237
        %v286 = vunpack.c.h.b16 %v237
        %v287 = vunpack.c.l.b16 %v238
        %v288 = vunpack.c.h.b16 %v238
        %v289 = vunpack.c.l.b16 %v239
        %v290 = vunpack.c.h.b16 %v239
        %v291 = vunpack.c.l.b16 %v240
        %v292 = vunpack.c.h.b16 %v240
        %v293 = vunpack.c.l.b16 %v241
        %v294 = vunpack.c.h.b16 %v241
        %v295 = vunpack.c.l.b16 %v242
        %v296 = vunpack.c.h.b16 %v242
        %v297 = vpack.c.b16 %v267, %v265
        %v298 = vpack.c.b16 %v268, %v266
        %v299 = vpack.c.b16 %v271, %v269
        %v300 = vpack.c.b16 %v272, %v270
        %v301 = vpack.c.b16 %v275, %v273
        %v302 = vpack.c.b16 %v276, %v274
        %v303 = vpack.c.b16 %v279, %v277
        %v304 = vpack.c.b16 %v280, %v278
        %v305 = vpack.c.b16 %v283, %v281
        %v306 = vpack.c.b16 %v284, %v282
        %v307 = vpack.c.b16 %v287, %v285
        %v308 = vpack.c.b16 %v288, %v286
        %v309 = vpack.c.b16 %v291, %v289
        %v310 = vpack.c.b16 %v292, %v290
        %v311 = vpack.c.b16 %v295, %v293
        %v312 = vpack.c.b16 %v296, %v294
        %329 = vmatpush.bf16.msra.mxu0 %v311
        %330 = vmatpush.bf16.msra.mxu0 %v309
        %331 = vmatpush.bf16.msra.mxu0 %v307
        %332 = vmatpush.bf16.msra.mxu0 %v305
        %333 = vmatpush.bf16.msra.mxu0 %v303
        %334 = vmatpush.bf16.msra.mxu0 %v301
        %335 = vmatpush.bf16.msra.mxu0 %v299
        %336 = vmatpush.bf16.msra.mxu0 %v297
        %337 = vmatmul.bf16.gmra.mxu0 %v226
        %v338 = vpop.f32.mrf.mxu0
        %v339 = vadd.f32 %v245, %v338
        %v340 = vpop.f32.mrf.mxu0
        %341 = vdwg.mxu0
        %342 = vmatpush.bf16.msra.mxu0 %v312
        %343 = vmatpush.bf16.msra.mxu0 %v310
        %344 = vmatpush.bf16.msra.mxu0 %v308
        %345 = vmatpush.bf16.msra.mxu0 %v306
        %346 = vmatpush.bf16.msra.mxu0 %v304
        %347 = vmatpush.bf16.msra.mxu0 %v302
        %348 = vmatpush.bf16.msra.mxu0 %v300
        %349 = vmatpush.bf16.msra.mxu0 %v298
        %350 = vmatmul.bf16.gmra.mxu0 %v226
        %v351 = vpop.f32.mrf.mxu0
        %v352 = vadd.f32 %v246, %v351
        %v353 = vpop.f32.mrf.mxu0
        %354 = vdwg.mxu0
        %v355 = vmax.f32 %v339, 0.0
        %v356 = vmax.f32 %v352, -30.0
        %v357 = vsub.f32 0.0, %v356
        %v358 = vmul.f32 %v357, 1.442695
        %v359 = vpow.pop %v358
        %v360 = vadd.f32 %v359, 1.0
        %v361 = vrcp.pop %v360
        %v362 = vsub.f32 %v355, %v225
        %v363 = vmul.f32 %v361, %v362
        %v364 = vadd.f32 %v225, %v363
        %365 = vst [vmem:[%s214] sm:$0xff] %v364
        %s366 = sand.u32 %s118, 1
        %s367 = scalar_lea.sflag [#allocation4], %s366
        %s368 = sand.u32 %s118, 1
        %s369 = smul.addr %s368, 8
        %s370 = scalar_lea.vmem [#allocation5], %s369
        // Predicated region
        $region37: #{_highway_2d.1} parent=31 // pred_check
          %p371 = pneg %p128
        $region38: #{_highway_2d.1} parent=31 // pred_check_branch
          %373 = sbr.rel (%p371) target = $region40
        $region39: #{_highway_2d.1} parent=31 // pred_region
          %375 = vsyncadd %s367, 0
          %s376 = sadd.s32 %s23, %s22
          %s377 = smul.addr %s376, 8
          %s378 = scalar_lea.hbm %s3, %s377
          %s380 = sshll.u32 %s370, 4
          %s381 = int_to_ptr.vmem [resolvable:$true] %s380
          %s382 = sshll.u32 %s378, 4
          %s383 = int_to_ptr.hbm [resolvable:$true] %s382
          %385 = dma.vmem_to_hbm [thread:$0]  %s381, 128, %s383, %s367
        $region40: #{_highway_2d.1} parent=31 // pred_fallthru
          _
      $region32: #{_highway_2d.1} parent=5 // pred_fallthru
        _
      %p386 = scmp.le.s32.totalorder 2, %s13
      // Predicated region
      $region41: #{_highway_2d.1} parent=5 // pred_check
        %p387 = pneg %p386
      $region42: #{_highway_2d.1} parent=5 // pred_check_branch
        %389 = sbr.rel (%p387) target = $region44
      $region43: #{_highway_2d.1} parent=5 // pred_region
        %s390 = ssub.s32 %s13, 2
        // Predicated region
        $region45: #{_highway_2d.1} parent=43 // pred_check
          %p391 = pneg %p134
        $region46: #{_highway_2d.1} parent=43 // pred_check_branch
          %393 = sbr.rel (%p391) target = $region48
        $region47: #{_highway_2d.1} parent=43 // pred_region
          %s394 = sand.u32 %s119, 1
          %s395 = scalar_lea.sflag [#allocation4], %s394
          %s396 = sand.u32 %s119, 1
          %s397 = smul.addr %s396, 8
          %s398 = scalar_lea.vmem [#allocation5], %s397
          %400 = dma.done %s395, 128
        $region48: #{_highway_2d.1} parent=43 // pred_fallthru
          _
      $region44: #{_highway_2d.1} parent=5 // pred_fallthru
        _
    $region6: #{_highway_2d.1} parent=1 // loop_footer
      %s17 = sadd.s32 1, %s13
    $region7: #{_highway_2d.1} parent=1 // loop_footer_branch
      %12 = sbr.rel target = $region3
    $region8: #{_highway_2d.1} parent=1 // loop_exit
      _
    %401 = vsyncpa [#allocation3], 1
    %s402 = scalar_lea.sflag [#allocation3], 1
    %403 = vsyncpa %s402, 1
    %404 = vsyncpa [#allocation4], 1
    %s405 = scalar_lea.sflag [#allocation4], 1
    %406 = vsyncpa %s405, 1

</llo_original>
